<compile_context>
chip_gen: v7x
topology: tpu7x:2x2x1
jax: 0.10.0
libtpu: 0.0.40
codegen_flags: <defaults>
</compile_context>

<pallas_src>
import functools

import jax
import jax.numpy as jnp
from jax.experimental import pallas as pl
from jax.experimental.pallas import tpu as pltpu

_LANE = 128
_SUBLANE = 8
_BLOCK_BYTES_TARGET = 2 * 1024 * 1024     # per-input, per-buffer block budget
_VMEM_LIMIT_BYTES = 32 * 1024 * 1024      # safe on v5e/v6e/v7x


# ---------------------------------------------------------------------------
# Fast path: D is a multiple of 128 -> rows viewed as (R, 128)
# ---------------------------------------------------------------------------
def _dice_sums_kernel_3d(logits_ref, targets_ref,
                         inter_ref, prob_ref, tgt_ref,
                         *, rows_total, tile_rows, need_mask):
    k = pl.program_id(1)  # reduction axis (row blocks)

    @pl.when(k == 0)
    def _():
        inter_ref[...] = jnp.zeros_like(inter_ref)
        prob_ref[...] = jnp.zeros_like(prob_ref)
        tgt_ref[...] = jnp.zeros_like(tgt_ref)

    x = logits_ref[...].astype(jnp.float32)      # (1, TR, 128)
    t = targets_ref[...].astype(jnp.float32)
    p = jax.nn.sigmoid(x)

    if need_mask:
        row = jax.lax.broadcasted_iota(jnp.int32, p.shape, 1) + k * tile_rows
        valid = row < rows_total
        p = jnp.where(valid, p, 0.0)
        t = jnp.where(valid, t, 0.0)

    # Sublane-axis sums: mostly cross-vreg VPU adds + one small intra-vreg
    # reduce; the result stays lane-dense (1, 1, 128).
    inter_ref[...] += jnp.sum(p * t, axis=1, keepdims=True)
    prob_ref[...] += jnp.sum(p, axis=1, keepdims=True)
    tgt_ref[...] += jnp.sum(t, axis=1, keepdims=True)


def _dice_partial_sums_3d(logits2d, targets2d):
    B, D = logits2d.shape
    R = D // _LANE
    x3 = logits2d.reshape(B, R, _LANE)     # free: contiguous split of last dim
    t3 = targets2d.reshape(B, R, _LANE)

    itemsize = max(jnp.dtype(logits2d.dtype).itemsize,
                   jnp.dtype(targets2d.dtype).itemsize)
    tr_cap = max(_SUBLANE, _BLOCK_BYTES_TARGET // (_LANE * itemsize))
    if R <= tr_cap:
        tile_rows = R                       # one block covers all rows
        need_mask = False
    else:
        tile_rows = (tr_cap // _SUBLANE) * _SUBLANE
        need_mask = (R % tile_rows != 0)
    nk = pl.cdiv(R, tile_rows)

    kernel = functools.partial(_dice_sums_kernel_3d,
                               rows_total=R,
                               tile_rows=tile_rows,
                               need_mask=need_mask)

    in_spec = pl.BlockSpec((1, tile_rows, _LANE), lambda b, k: (b, k, 0))
    out_spec = pl.BlockSpec((1, 1, _LANE), lambda b, k: (b, 0, 0))
    out_shape = tuple(jax.ShapeDtypeStruct((B, 1, _LANE), jnp.float32)
                      for _ in range(3))

    inter_p, prob_p, tgt_p = pl.pallas_call(
        kernel,
        out_shape=out_shape,
        grid_spec=pltpu.PrefetchScalarGridSpec(
            num_scalar_prefetch=0,
            grid=(B, nk),
            in_specs=[in_spec, in_spec],
            out_specs=[out_spec, out_spec, out_spec],
        ),
        compiler_params=pltpu.CompilerParams(
            dimension_semantics=("parallel", "arbitrary"),
            vmem_limit_bytes=_VMEM_LIMIT_BYTES),
    )(x3, t3)

    inter = jnp.sum(inter_p[:, 0, :], axis=-1)   # tiny (B, 128) finish in JAX
    prob = jnp.sum(prob_p[:, 0, :], axis=-1)
    tgt = jnp.sum(tgt_p[:, 0, :], axis=-1)
    return inter, prob, tgt


# ---------------------------------------------------------------------------
# Fallback path: D not a multiple of 128 -> 2-D blocks, in-kernel lane mask
# ---------------------------------------------------------------------------
def _dice_sums_kernel_2d(logits_ref, targets_ref,
                         inter_ref, prob_ref, tgt_ref,
                         *, cols_total, tile_cols, need_mask):
    k = pl.program_id(0)

    @pl.when(k == 0)
    def _():
        inter_ref[...] = jnp.zeros_like(inter_ref)
        prob_ref[...] = jnp.zeros_like(prob_ref)
        tgt_ref[...] = jnp.zeros_like(tgt_ref)

    x = logits_ref[...].astype(jnp.float32)      # (B, TILE)
    t = targets_ref[...].astype(jnp.float32)
    p = jax.nn.sigmoid(x)

    if need_mask:
        col = jax.lax.broadcasted_iota(jnp.int32, p.shape, 1) + k * tile_cols
        valid = col < cols_total
        p = jnp.where(valid, p, 0.0)
        t = jnp.where(valid, t, 0.0)

    inter_ref[...] += jnp.sum(p * t, axis=1, keepdims=True)
    prob_ref[...] += jnp.sum(p, axis=1, keepdims=True)
    tgt_ref[...] += jnp.sum(t, axis=1, keepdims=True)


def _dice_partial_sums_2d(logits2d, targets2d):
    B, D = logits2d.shape
    itemsize = max(jnp.dtype(logits2d.dtype).itemsize,
                   jnp.dtype(targets2d.dtype).itemsize)
    tile_cap = max(_LANE,
                   (_BLOCK_BYTES_TARGET // (B * itemsize)) // _LANE * _LANE)
    d_up = pl.cdiv(D, _LANE) * _LANE
    tile_cols = min(tile_cap, d_up)
    nk = pl.cdiv(D, tile_cols)
    need_mask = (D % tile_cols != 0)

    kernel = functools.partial(_dice_sums_kernel_2d,
                               cols_total=D,
                               tile_cols=tile_cols,
                               need_mask=need_mask)

    in_spec = pl.BlockSpec((B, tile_cols), lambda k: (0, k))
    out_spec = pl.BlockSpec((B, 1), lambda k: (0, 0))
    out_shape = tuple(jax.ShapeDtypeStruct((B, 1), jnp.float32)
                      for _ in range(3))

    inter_p, prob_p, tgt_p = pl.pallas_call(
        kernel,
        out_shape=out_shape,
        grid_spec=pltpu.PrefetchScalarGridSpec(
            num_scalar_prefetch=0,
            grid=(nk,),
            in_specs=[in_spec, in_spec],
            out_specs=[out_spec, out_spec, out_spec],
        ),
        compiler_params=pltpu.CompilerParams(
            dimension_semantics=("arbitrary",),
            vmem_limit_bytes=_VMEM_LIMIT_BYTES),
    )(logits2d, targets2d)

    return inter_p[:, 0], prob_p[:, 0], tgt_p[:, 0]


# ---------------------------------------------------------------------------
# Public wrapper: DiceLoss.forward
# ---------------------------------------------------------------------------
@functools.partial(jax.jit, static_argnames=("eps",))
def dice_loss(logits, targets, eps: float = 1e-9):
    """Equivalent of DiceLoss.forward(logits, targets)."""
    B = logits.shape[0]
    logits2d = logits.reshape(B, -1)
    targets2d = targets.reshape(B, -1)
    D = logits2d.shape[1]

    if D % _LANE == 0:
        inter, prob, tgt = _dice_partial_sums_3d(logits2d, targets2d)
    else:
        inter, prob, tgt = _dice_partial_sums_2d(logits2d, targets2d)

    intersection = 2.0 * inter
    union = prob + tgt
    dice_score = (intersection + eps) / (union + eps)
    return 1.0 - jnp.mean(dice_score)


def _reference_dice_loss(logits, targets, eps=1e-9):
    B = logits.shape[0]
    p = jax.nn.sigmoid(logits.astype(jnp.float32)).reshape(B, -1)
    t = targets.astype(jnp.float32).reshape(B, -1)
    inter = 2.0 * jnp.sum(p * t, axis=1)
    union = jnp.sum(p, axis=1) + jnp.sum(t, axis=1)
    return 1.0 - jnp.mean((inter + eps) / (union + eps))


if __name__ == "__main__":
    key = jax.random.PRNGKey(0)
    k1, k2 = jax.random.split(key)

    B, C, H, W = 2, 4, 16, 16
    logits = jax.random.normal(k1, (B, C, H, W), dtype=jnp.float32)
    targets = (jax.random.uniform(k2, (B, C, H, W)) > 0.5).astype(jnp.float32)

    loss = dice_loss(logits, targets)
    loss = jax.block_until_ready(loss)

    ref = _reference_dice_loss(logits, targets)
    assert jnp.allclose(loss, ref, atol=1e-5, rtol=1e-5), (loss, ref)

    print("KERNEL_OK")
</pallas_src>

<mosaic_0001>
module attributes {stable_mosaic.version = 11 : i64} {
  func.func @_dice_sums_kernel_3d(%arg0: i32, %arg1: i32, %arg2: memref<1x8x128xf32, #tpu.memory_space<vmem>>, %arg3: memref<1x8x128xf32, #tpu.memory_space<vmem>>, %arg4: memref<1x1x128xf32, #tpu.memory_space<vmem>>, %arg5: memref<1x1x128xf32, #tpu.memory_space<vmem>>, %arg6: memref<1x1x128xf32, #tpu.memory_space<vmem>>) attributes {dimension_semantics = [#tpu.dimension_semantics<parallel>, #tpu.dimension_semantics<arbitrary>], iteration_bounds = array<i64: 2, 1>, scalar_prefetch = 0 : i64, scratch_operands = 0 : i64, tpu.core_type = #tpu.core_type<tc>, window_params = [{transform_indices = @transform_0, window_bounds = array<i64: 1, 8, 128>}, {transform_indices = @transform_1, window_bounds = array<i64: 1, 8, 128>}, {transform_indices = @transform_2, window_bounds = array<i64: 1, 1, 128>}, {transform_indices = @transform_3, window_bounds = array<i64: 1, 1, 128>}, {transform_indices = @transform_4, window_bounds = array<i64: 1, 1, 128>}]} {
    %c0_i32 = arith.constant 0 : i32
    %0 = arith.cmpi eq, %arg1, %c0_i32 : i32
    %1 = arith.extui %0 : i1 to i32
    %c0_i32_0 = arith.constant 0 : i32
    %2 = arith.cmpi ne, %1, %c0_i32_0 : i32
    scf.if %2 {
      %cst_27 = arith.constant 0.000000e+00 : f32
      %26 = vector.broadcast %cst_27 : f32 to vector<1x1x128xf32>
      %c0_28 = arith.constant 0 : index
      %c0_29 = arith.constant 0 : index
      %c0_30 = arith.constant 0 : index
      %27 = vector.load %arg4[%c0_28, %c0_29, %c0_30] : memref<1x1x128xf32, #tpu.memory_space<vmem>>, vector<1x1x128xf32>
      tpu.vector_store %arg4[%c0_28, %c0_29, %c0_30], %26 {strides = array<i32>} : memref<1x1x128xf32, #tpu.memory_space<vmem>>, vector<1x1x128xf32>,
      %cst_31 = arith.constant 0.000000e+00 : f32
      %28 = vector.broadcast %cst_31 : f32 to vector<1x1x128xf32>
      %c0_32 = arith.constant 0 : index
      %c0_33 = arith.constant 0 : index
      %c0_34 = arith.constant 0 : index
      %29 = vector.load %arg5[%c0_32, %c0_33, %c0_34] : memref<1x1x128xf32, #tpu.memory_space<vmem>>, vector<1x1x128xf32>
      tpu.vector_store %arg5[%c0_32, %c0_33, %c0_34], %28 {strides = array<i32>} : memref<1x1x128xf32, #tpu.memory_space<vmem>>, vector<1x1x128xf32>,
      %cst_35 = arith.constant 0.000000e+00 : f32
      %30 = vector.broadcast %cst_35 : f32 to vector<1x1x128xf32>
      %c0_36 = arith.constant 0 : index
      %c0_37 = arith.constant 0 : index
      %c0_38 = arith.constant 0 : index
      %31 = vector.load %arg6[%c0_36, %c0_37, %c0_38] : memref<1x1x128xf32, #tpu.memory_space<vmem>>, vector<1x1x128xf32>
      tpu.vector_store %arg6[%c0_36, %c0_37, %c0_38], %30 {strides = array<i32>} : memref<1x1x128xf32, #tpu.memory_space<vmem>>, vector<1x1x128xf32>,
    } else {
    }
    %c0 = arith.constant 0 : index
    %c0_1 = arith.constant 0 : index
    %c0_2 = arith.constant 0 : index
    %3 = vector.load %arg2[%c0, %c0_1, %c0_2] : memref<1x8x128xf32, #tpu.memory_space<vmem>>, vector<1x8x128xf32>
    %c0_3 = arith.constant 0 : index
    %c0_4 = arith.constant 0 : index
    %c0_5 = arith.constant 0 : index
    %4 = vector.load %arg3[%c0_3, %c0_4, %c0_5] : memref<1x8x128xf32, #tpu.memory_space<vmem>>, vector<1x8x128xf32>
    %5 = arith.negf %3 : vector<1x8x128xf32>
    %6 = math.exp %5 : vector<1x8x128xf32>
    %cst = arith.constant 1.000000e+00 : f32
    %7 = vector.broadcast %cst : f32 to vector<1x8x128xf32>
    %8 = arith.addf %7, %6 : vector<1x8x128xf32>
    %9 = arith.divf %7, %8 : vector<1x8x128xf32>
    %c0_6 = arith.constant 0 : index
    %c0_7 = arith.constant 0 : index
    %c0_8 = arith.constant 0 : index
    %10 = vector.load %arg4[%c0_6, %c0_7, %c0_8] : memref<1x1x128xf32, #tpu.memory_space<vmem>>, vector<1x1x128xf32>
    %11 = arith.mulf %9, %4 : vector<1x8x128xf32>
    %cst_9 = arith.constant dense<0.000000e+00> : vector<1x128xf32>
    %12 = vector.multi_reduction <add>, %11, %cst_9 [1] : vector<1x8x128xf32> to vector<1x128xf32>
    %13 = vector.shape_cast %12 : vector<1x128xf32> to vector<1x1x128xf32>
    %14 = arith.addf %10, %13 : vector<1x1x128xf32>
    %c0_10 = arith.constant 0 : index
    %c0_11 = arith.constant 0 : index
    %c0_12 = arith.constant 0 : index
    %15 = vector.load %arg4[%c0_10, %c0_11, %c0_12] : memref<1x1x128xf32, #tpu.memory_space<vmem>>, vector<1x1x128xf32>
    tpu.vector_store %arg4[%c0_10, %c0_11, %c0_12], %14 {strides = array<i32>} : memref<1x1x128xf32, #tpu.memory_space<vmem>>, vector<1x1x128xf32>,
    %c0_13 = arith.constant 0 : index
    %c0_14 = arith.constant 0 : index
    %c0_15 = arith.constant 0 : index
    %16 = vector.load %arg5[%c0_13, %c0_14, %c0_15] : memref<1x1x128xf32, #tpu.memory_space<vmem>>, vector<1x1x128xf32>
    %cst_16 = arith.constant dense<0.000000e+00> : vector<1x128xf32>
    %17 = vector.multi_reduction <add>, %9, %cst_16 [1] : vector<1x8x128xf32> to vector<1x128xf32>
    %18 = vector.shape_cast %17 : vector<1x128xf32> to vector<1x1x128xf32>
    %19 = arith.addf %16, %18 : vector<1x1x128xf32>
    %c0_17 = arith.constant 0 : index
    %c0_18 = arith.constant 0 : index
    %c0_19 = arith.constant 0 : index
    %20 = vector.load %arg5[%c0_17, %c0_18, %c0_19] : memref<1x1x128xf32, #tpu.memory_space<vmem>>, vector<1x1x128xf32>
    tpu.vector_store %arg5[%c0_17, %c0_18, %c0_19], %19 {strides = array<i32>} : memref<1x1x128xf32, #tpu.memory_space<vmem>>, vector<1x1x128xf32>,
    %c0_20 = arith.constant 0 : index
    %c0_21 = arith.constant 0 : index
    %c0_22 = arith.constant 0 : index
    %21 = vector.load %arg6[%c0_20, %c0_21, %c0_22] : memref<1x1x128xf32, #tpu.memory_space<vmem>>, vector<1x1x128xf32>
    %cst_23 = arith.constant dense<0.000000e+00> : vector<1x128xf32>
    %22 = vector.multi_reduction <add>, %4, %cst_23 [1] : vector<1x8x128xf32> to vector<1x128xf32>
    %23 = vector.shape_cast %22 : vector<1x128xf32> to vector<1x1x128xf32>
    %24 = arith.addf %21, %23 : vector<1x1x128xf32>
    %c0_24 = arith.constant 0 : index
    %c0_25 = arith.constant 0 : index
    %c0_26 = arith.constant 0 : index
    %25 = vector.load %arg6[%c0_24, %c0_25, %c0_26] : memref<1x1x128xf32, #tpu.memory_space<vmem>>, vector<1x1x128xf32>
    tpu.vector_store %arg6[%c0_24, %c0_25, %c0_26], %24 {strides = array<i32>} : memref<1x1x128xf32, #tpu.memory_space<vmem>>, vector<1x1x128xf32>,
    return
  }
  func.func @transform_0(%arg0: i32, %arg1: i32) -> (i32, i32, i32) {
    %c0_i32 = arith.constant 0 : i32
    %c0_i32_0 = arith.constant 0 : i32
    return %arg0, %arg1, %c0_i32 : i32, i32, i32
  }
  func.func @transform_1(%arg0: i32, %arg1: i32) -> (i32, i32, i32) {
    %c0_i32 = arith.constant 0 : i32
    %c0_i32_0 = arith.constant 0 : i32
    return %arg0, %arg1, %c0_i32 : i32, i32, i32
  }
  func.func @transform_2(%arg0: i32, %arg1: i32) -> (i32, i32, i32) {
    %c0_i32 = arith.constant 0 : i32
    %c0_i32_0 = arith.constant 0 : i32
    %c0_i32_1 = arith.constant 0 : i32
    return %arg0, %c0_i32, %c0_i32_0 : i32, i32, i32
  }
  func.func @transform_3(%arg0: i32, %arg1: i32) -> (i32, i32, i32) {
    %c0_i32 = arith.constant 0 : i32
    %c0_i32_0 = arith.constant 0 : i32
    %c0_i32_1 = arith.constant 0 : i32
    return %arg0, %c0_i32, %c0_i32_0 : i32, i32, i32
  }
  func.func @transform_4(%arg0: i32, %arg1: i32) -> (i32, i32, i32) {
    %c0_i32 = arith.constant 0 : i32
    %c0_i32_0 = arith.constant 0 : i32
    %c0_i32_1 = arith.constant 0 : i32
    return %arg0, %c0_i32, %c0_i32_0 : i32, i32, i32
  }
}

</mosaic_0001>

<llo_original>
// kernel: dice_loss.1
$region0: #{dice_loss.1}
  #allocation0 [shape = 'u32[]', space=smem, size = 0x4, offset = 0x4, fixed_abs, tag = 'smem constant byte address 0x4 - core index']
  #allocation1 [shape = 'u32[144,128]{1,0:T(1,128)}', space=vmem, size = 0x12000, scoped, tag = 'internal scratch']
  %s0 = inlined_call_operand.vmem [shape: f32[2,8,128], index: 0, kind: input, shape index: {}]
  %s1 = inlined_call_operand.vmem [shape: f32[2,8,128], index: 1, kind: input, shape index: {}]
  %s2 = inlined_call_operand.vmem [shape: f32[2,1,128], index: 2, kind: output, shape index: {0}]
  %s3 = inlined_call_operand.vmem [shape: f32[2,1,128], index: 3, kind: output, shape index: {1}]
  %s4 = inlined_call_operand.vmem [shape: f32[2,1,128], index: 4, kind: output, shape index: {2}]
  %5 = xla_tuple %s2, %s3, %s4
  %s6 = sld [smem:[#allocation0]]
  $region61: #{dice_loss.1} parent=0
    _
  %s8 = ssub.s32 1, %s6
  %s9 = scalar_select 0, %s8, %s6
  loop: start=0, step=1, limit=4
  $region2: #{dice_loss.1} parent=0 // loop_pre_header
    _
  $region3: #{dice_loss.1} parent=0 // loop_header
    %s11 = sphi 0, %s15
    %p12 = scmp.ge.s32.totalorder %s11, 4
    %s18 = sphi 0, %s30
    %s19 = sphi 0, %s26
    %s20 = sphi 0, %s18
    %s21 = sphi 0, %s19
    %s22 = sphi 0, %s20
    %s23 = sphi 0, %s21
    %s35 = sphi 0, %s37
    %s38 = sphi 0, %s35
    %s39 = sphi 0, %s38
    %s55 = sphi 0, %s39
    %s63 = sphi 0, %s65
    %s66 = sphi 0, %s63
    %s67 = sphi 0, %s66
    %s83 = sphi 0, %s67
    %s89 = sphi 0, %s91
    %s92 = sphi 0, %s89
    %s93 = sphi 0, %s92
    %s109 = sphi 0, %s93
    %s115 = sphi 0, %s117
    %s118 = sphi 0, %s115
    %s119 = sphi 0, %s118
    %s135 = sphi 0, %s119
    %s141 = sphi 0, %s143
    %s144 = sphi 0, %s141
    %s145 = sphi 0, %s144
    %s161 = sphi 0, %s145
  $region4: #{dice_loss.1} parent=0 // loop_header_branch
    %14 = sbr.rel (%p12) target = $region8
  $region5: #{dice_loss.1} parent=0 // loop_body
    %s16 = ssub.s32 %s11, 1
    %s17 = ssub.s32 %s11, 2
    %s24 = sadd.s32 1, %s19
    %p25 = scmp.ge.s32.totalorder %s24, 1
    %s26 = scalar_select %p25, 0, %s24
    %s27 = sadd.s32 1, %s18
    %s28 = scalar_select %p25, %s27, %s18
    %p29 = scmp.ge.s32.totalorder %s28, 2
    %s30 = scalar_select %p29, 0, %s28
    %s31 = ssub.s32 %s18, %s30
    %s32 = ssub.s32 %s19, %s26
    %s33 = sor.u32 %s31, %s32
    %p34 = scmp.eq.s32.totalorder %s33, 0
    %s36 = sadd.s32 %s35, 1
    %s37 = scalar_select %p34, %s35, %s36
    %p40 = pneg %p34
    %p41 = scmp.eq.s32.totalorder %s11, 1
    %p42 = por %p40, %p41
    %p43 = scmp.ne.s32.totalorder %s35, %s38
    %p44 = scmp.eq.s32.totalorder %s11, 0
    %p45 = por %p43, %p44
    %p46 = scmp.ne.s32.totalorder %s35, %s38
    %p47 = scmp.eq.s32.totalorder %s16, 1
    %p48 = por %p46, %p47
    %p49 = scmp.ne.s32.totalorder %s38, %s39
    %p50 = scmp.eq.s32.totalorder %s16, 0
    %p51 = por %p49, %p50
    %p52 = scmp.ne.s32.totalorder %s38, %s39
    %p53 = scmp.eq.s32.totalorder %s17, 1
    %p54 = por %p52, %p53
    %p56 = scmp.ne.s32.totalorder %s39, %s55
    %p57 = scmp.eq.s32.totalorder %s17, 0
    %p58 = por %p56, %p57
    %s59 = ssub.s32 %s18, %s30
    %s60 = ssub.s32 %s19, %s26
    %s61 = sor.u32 %s59, %s60
    %p62 = scmp.eq.s32.totalorder %s61, 0
    %s64 = sadd.s32 %s63, 1
    %s65 = scalar_select %p62, %s63, %s64
    %p68 = pneg %p62
    %p69 = scmp.eq.s32.totalorder %s11, 1
    %p70 = por %p68, %p69
    %p71 = scmp.ne.s32.totalorder %s63, %s66
    %p72 = scmp.eq.s32.totalorder %s11, 0
    %p73 = por %p71, %p72
    %p74 = scmp.ne.s32.totalorder %s63, %s66
    %p75 = scmp.eq.s32.totalorder %s16, 1
    %p76 = por %p74, %p75
    %p77 = scmp.ne.s32.totalorder %s66, %s67
    %p78 = scmp.eq.s32.totalorder %s16, 0
    %p79 = por %p77, %p78
    %p80 = scmp.ne.s32.totalorder %s66, %s67
    %p81 = scmp.eq.s32.totalorder %s17, 1
    %p82 = por %p80, %p81
    %p84 = scmp.ne.s32.totalorder %s67, %s83
    %p85 = scmp.eq.s32.totalorder %s17, 0
    %p86 = por %p84, %p85
    %s87 = ssub.s32 %s18, %s30
    %p88 = scmp.eq.s32.totalorder %s87, 0
    %s90 = sadd.s32 %s89, 1
    %s91 = scalar_select %p88, %s89, %s90
    %p94 = pneg %p88
    %p95 = scmp.eq.s32.totalorder %s11, 1
    %p96 = por %p94, %p95
    %p97 = scmp.ne.s32.totalorder %s89, %s92
    %p98 = scmp.eq.s32.totalorder %s11, 0
    %p99 = por %p97, %p98
    %p100 = scmp.ne.s32.totalorder %s89, %s92
    %p101 = scmp.eq.s32.totalorder %s16, 1
    %p102 = por %p100, %p101
    %p103 = scmp.ne.s32.totalorder %s92, %s93
    %p104 = scmp.eq.s32.totalorder %s16, 0
    %p105 = por %p103, %p104
    %p106 = scmp.ne.s32.totalorder %s92, %s93
    %p107 = scmp.eq.s32.totalorder %s17, 1
    %p108 = por %p106, %p107
    %p110 = scmp.ne.s32.totalorder %s93, %s109
    %p111 = scmp.eq.s32.totalorder %s17, 0
    %p112 = por %p110, %p111
    %s113 = ssub.s32 %s18, %s30
    %p114 = scmp.eq.s32.totalorder %s113, 0
    %s116 = sadd.s32 %s115, 1
    %s117 = scalar_select %p114, %s115, %s116
    %p120 = pneg %p114
    %p121 = scmp.eq.s32.totalorder %s11, 1
    %p122 = por %p120, %p121
    %p123 = scmp.ne.s32.totalorder %s115, %s118
    %p124 = scmp.eq.s32.totalorder %s11, 0
    %p125 = por %p123, %p124
    %p126 = scmp.ne.s32.totalorder %s115, %s118
    %p127 = scmp.eq.s32.totalorder %s16, 1
    %p128 = por %p126, %p127
    %p129 = scmp.ne.s32.totalorder %s118, %s119
    %p130 = scmp.eq.s32.totalorder %s16, 0
    %p131 = por %p129, %p130
    %p132 = scmp.ne.s32.totalorder %s118, %s119
    %p133 = scmp.eq.s32.totalorder %s17, 1
    %p134 = por %p132, %p133
    %p136 = scmp.ne.s32.totalorder %s119, %s135
    %p137 = scmp.eq.s32.totalorder %s17, 0
    %p138 = por %p136, %p137
    %s139 = ssub.s32 %s18, %s30
    %p140 = scmp.eq.s32.totalorder %s139, 0
    %s142 = sadd.s32 %s141, 1
    %s143 = scalar_select %p140, %s141, %s142
    %p146 = pneg %p140
    %p147 = scmp.eq.s32.totalorder %s11, 1
    %p148 = por %p146, %p147
    %p149 = scmp.ne.s32.totalorder %s141, %s144
    %p150 = scmp.eq.s32.totalorder %s11, 0
    %p151 = por %p149, %p150
    %p152 = scmp.ne.s32.totalorder %s141, %s144
    %p153 = scmp.eq.s32.totalorder %s16, 1
    %p154 = por %p152, %p153
    %p155 = scmp.ne.s32.totalorder %s144, %s145
    %p156 = scmp.eq.s32.totalorder %s16, 0
    %p157 = por %p155, %p156
    %p158 = scmp.ne.s32.totalorder %s144, %s145
    %p159 = scmp.eq.s32.totalorder %s17, 1
    %p160 = por %p158, %p159
    %p162 = scmp.ne.s32.totalorder %s145, %s161
    %p163 = scmp.eq.s32.totalorder %s17, 0
    %p164 = por %p162, %p163
    %p165 = scmp.le.s32.totalorder 1, %s11
    %p166 = scmp.lt.s32.totalorder %s11, 3
    %p167 = pnand %p165, %p166
    %p168 = pneg %p167
    // Predicated region
    $region9: #{dice_loss.1} parent=5 // pred_check
      _
    $region10: #{dice_loss.1} parent=5 // pred_check_branch
      %170 = sbr.rel (%p167) target = $region12
    $region11: #{dice_loss.1} parent=5 // pred_region
      %s171 = ssub.s32 %s11, 1
    $region12: #{dice_loss.1} parent=5 // pred_fallthru
      _
    %p172 = scmp.lt.s32.totalorder %s11, 2
    // Predicated region
    $region13: #{dice_loss.1} parent=5 // pred_check
      %p173 = pneg %p172
    $region14: #{dice_loss.1} parent=5 // pred_check_branch
      %175 = sbr.rel (%p173) target = $region16
    $region15: #{dice_loss.1} parent=5 // pred_region
      // Predicated region
      $region17: #{dice_loss.1} parent=15 // pred_check
        %p176 = pneg %p45
      $region18: #{dice_loss.1} parent=15 // pred_check_branch
        %178 = sbr.rel (%p176) target = $region20
      $region19: #{dice_loss.1} parent=15 // pred_region
        %p179 = scmp.lt.s32.totalorder %s18, 1
        %s180 = scalar_select %p179, %s18, 1
        %p181 = scmp.lt.s32.totalorder %s19, 0
        %s182 = scalar_select %p181, %s19, 0
        %s183 = sadd.s32 %s182, %s180
        %s184 = smul.addr %s183, 8
        %s185 = scalar_lea.vmem %s0, %s184
      $region20: #{dice_loss.1} parent=15 // pred_fallthru
        _
      // Predicated region
      $region21: #{dice_loss.1} parent=15 // pred_check
        %p186 = pneg %p73
      $region22: #{dice_loss.1} parent=15 // pred_check_branch
        %188 = sbr.rel (%p186) target = $region24
      $region23: #{dice_loss.1} parent=15 // pred_region
        %p189 = scmp.lt.s32.totalorder %s18, 1
        %s190 = scalar_select %p189, %s18, 1
        %p191 = scmp.lt.s32.totalorder %s19, 0
        %s192 = scalar_select %p191, %s19, 0
        %s193 = sadd.s32 %s192, %s190
        %s194 = smul.addr %s193, 8
        %s195 = scalar_lea.vmem %s1, %s194
      $region24: #{dice_loss.1} parent=15 // pred_fallthru
        _
    $region16: #{dice_loss.1} parent=5 // pred_fallthru
      _
    %p196 = scmp.le.s32.totalorder 1, %s11
    %p197 = scmp.lt.s32.totalorder %s11, 3
    %p198 = pnand %p196, %p197
    %p199 = pneg %p198
    // Predicated region
    $region25: #{dice_loss.1} parent=5 // pred_check
      _
    $region26: #{dice_loss.1} parent=5 // pred_check_branch
      %201 = sbr.rel (%p198) target = $region28
    $region27: #{dice_loss.1} parent=5 // pred_region
      %s202 = ssub.s32 %s11, 1
      %p203 = scmp.lt.s32.totalorder %s20, 1
      %s204 = scalar_select %p203, %s20, 1
      %p205 = scmp.lt.s32.totalorder %s21, 0
      %s206 = scalar_select %p205, %s21, 0
      %s207 = sadd.s32 %s206, %s204
      %s208 = smul.addr %s207, 8
      %s209 = scalar_lea.vmem %s0, %s208
      %p210 = pneg %p51
      %p211 = pneg %p48
      %p212 = scmp.lt.s32.totalorder %s20, 1
      %s213 = scalar_select %p212, %s20, 1
      %p214 = scmp.lt.s32.totalorder %s21, 0
      %s215 = scalar_select %p214, %s21, 0
      %s216 = sadd.s32 %s215, %s213
      %s217 = smul.addr %s216, 8
      %s218 = scalar_lea.vmem %s1, %s217
      %p219 = pneg %p79
      %p220 = pneg %p76
      %p221 = pneg %p105
      %p222 = pneg %p102
      %p223 = scmp.lt.s32.totalorder %s20, 1
      %s224 = scalar_select %p223, %s20, 1
      %s225 = scalar_lea.vmem %s2, %s224
      %p226 = pneg %p131
      %p227 = pneg %p128
      %p228 = scmp.lt.s32.totalorder %s20, 1
      %s229 = scalar_select %p228, %s20, 1
      %s230 = scalar_lea.vmem %s3, %s229
      %p231 = pneg %p157
      %p232 = pneg %p154
      %p233 = scmp.lt.s32.totalorder %s20, 1
      %s234 = scalar_select %p233, %s20, 1
      %s235 = scalar_lea.vmem %s4, %s234
      %p236 = scmp.lt.s32.totalorder %s20, 1
      %s237 = scalar_select %p236, %s20, 1
      %p238 = scmp.lt.s32.totalorder %s21, 0
      %s239 = scalar_select %p238, %s21, 0
      %s240 = sadd.s32 %s239, %s237
      %s241 = smul.addr %s240, 8
      %s242 = scalar_lea.vmem %s0, %s241
      %p243 = scmp.lt.s32.totalorder %s20, 1
      %s244 = scalar_select %p243, %s20, 1
      %p245 = scmp.lt.s32.totalorder %s21, 0
      %s246 = scalar_select %p245, %s21, 0
      %s247 = sadd.s32 %s246, %s244
      %s248 = smul.addr %s247, 8
      %s249 = scalar_lea.vmem %s1, %s248
      %p250 = scmp.lt.s32.totalorder %s20, 1
      %s251 = scalar_select %p250, %s20, 1
      %s252 = scalar_lea.vmem %s2, %s251
      %p253 = scmp.lt.s32.totalorder %s20, 1
      %s254 = scalar_select %p253, %s20, 1
      %s255 = scalar_lea.vmem %s3, %s254
      %p256 = scmp.lt.s32.totalorder %s20, 1
      %s257 = scalar_select %p256, %s20, 1
      %s258 = scalar_lea.vmem %s4, %s257
      %p259 = scmp.eq.s32.totalorder %s21, 0
      // Predicated region
      $region29: #{dice_loss.1} parent=27 // pred_check
        %p260 = pneg %p259
      $region30: #{dice_loss.1} parent=27 // pred_check_branch
        %262 = sbr.rel (%p260) target = $region32
      $region31: #{dice_loss.1} parent=27 // pred_region
        %263 = vst [vmem:[%s252] sm:$0x1] 0.0
        %264 = vst [vmem:[%s255] sm:$0x1] 0.0
        %265 = vst [vmem:[%s258] sm:$0x1] 0.0
      $region32: #{dice_loss.1} parent=27 // pred_fallthru
        _
      %v266 = vld [vmem:[%s242] sm:$0xff]
      %v267 = vld [vmem:[%s249] sm:$0xff]
      %v268 = vxor.u32 %v266, 2147483648
      %v269 = vmul.f32 %v268, 1.442695
      %v270 = vpow.pop %v269
      %v271 = vadd.f32 %v270, 1.0
      %v272 = vrcp.pop %v271
      %v273 = vmul.f32 1.0, %v272
      %v274 = vld [vmem:[%s252] sm:$0x1]
      %v275 = vmul.f32 %v273, %v267
      %v276 = vrot.slane %v275, 4
      %v277 = vadd.f32 %v275, %v276
      %v278 = vrot.slane %v277, 2
      %v279 = vadd.f32 %v277, %v278
      %v280 = vrot.slane %v279, 1
      %v281 = vadd.f32 %v279, %v280
      %v282 = vadd.f32 %v274, %v281
      %283 = vst [vmem:[%s252] sm:$0x1] %v282
      %v284 = vld [vmem:[%s255] sm:$0x1]
      %v285 = vrot.slane %v273, 4
      %v286 = vadd.f32 %v273, %v285
      %v287 = vrot.slane %v286, 2
      %v288 = vadd.f32 %v286, %v287
      %v289 = vrot.slane %v288, 1
      %v290 = vadd.f32 %v288, %v289
      %v291 = vadd.f32 %v284, %v290
      %292 = vst [vmem:[%s255] sm:$0x1] %v291
      %v293 = vld [vmem:[%s258] sm:$0x1]
      %v294 = vrot.slane %v267, 4
      %v295 = vadd.f32 %v267, %v294
      %v296 = vrot.slane %v295, 2
      %v297 = vadd.f32 %v295, %v296
      %v298 = vrot.slane %v297, 1
      %v299 = vadd.f32 %v297, %v298
      %v300 = vadd.f32 %v293, %v299
      %301 = vst [vmem:[%s258] sm:$0x1] %v300
      %p302 = scmp.lt.s32.totalorder %s20, 1
      %s303 = scalar_select %p302, %s20, 1
      %s304 = scalar_lea.vmem %s2, %s303
      %p305 = scmp.lt.s32.totalorder %s20, 1
      %s306 = scalar_select %p305, %s20, 1
      %s307 = scalar_lea.vmem %s3, %s306
      %p308 = scmp.lt.s32.totalorder %s20, 1
      %s309 = scalar_select %p308, %s20, 1
      %s310 = scalar_lea.vmem %s4, %s309
      // Predicated region
      $region33: #{dice_loss.1} parent=27 // pred_check
        %p311 = pneg %p102
      $region34: #{dice_loss.1} parent=27 // pred_check_branch
        %313 = sbr.rel (%p311) target = $region36
      $region35: #{dice_loss.1} parent=27 // pred_region
        _
      $region36: #{dice_loss.1} parent=27 // pred_fallthru
        _
      // Predicated region
      $region37: #{dice_loss.1} parent=27 // pred_check
        %p314 = pneg %p128
      $region38: #{dice_loss.1} parent=27 // pred_check_branch
        %316 = sbr.rel (%p314) target = $region40
      $region39: #{dice_loss.1} parent=27 // pred_region
        _
      $region40: #{dice_loss.1} parent=27 // pred_fallthru
        _
      // Predicated region
      $region41: #{dice_loss.1} parent=27 // pred_check
        %p317 = pneg %p154
      $region42: #{dice_loss.1} parent=27 // pred_check_branch
        %319 = sbr.rel (%p317) target = $region44
      $region43: #{dice_loss.1} parent=27 // pred_region
        _
      $region44: #{dice_loss.1} parent=27 // pred_fallthru
        _
    $region28: #{dice_loss.1} parent=5 // pred_fallthru
      _
    %p320 = scmp.le.s32.totalorder 2, %s11
    // Predicated region
    $region45: #{dice_loss.1} parent=5 // pred_check
      %p321 = pneg %p320
    $region46: #{dice_loss.1} parent=5 // pred_check_branch
      %323 = sbr.rel (%p321) target = $region48
    $region47: #{dice_loss.1} parent=5 // pred_region
      %s324 = ssub.s32 %s11, 2
      // Predicated region
      $region49: #{dice_loss.1} parent=47 // pred_check
        %p325 = pneg %p108
      $region50: #{dice_loss.1} parent=47 // pred_check_branch
        %327 = sbr.rel (%p325) target = $region52
      $region51: #{dice_loss.1} parent=47 // pred_region
        %p328 = scmp.lt.s32.totalorder %s22, 1
        %s329 = scalar_select %p328, %s22, 1
        %s330 = scalar_lea.vmem %s2, %s329
      $region52: #{dice_loss.1} parent=47 // pred_fallthru
        _
      // Predicated region
      $region53: #{dice_loss.1} parent=47 // pred_check
        %p331 = pneg %p134
      $region54: #{dice_loss.1} parent=47 // pred_check_branch
        %333 = sbr.rel (%p331) target = $region56
      $region55: #{dice_loss.1} parent=47 // pred_region
        %p334 = scmp.lt.s32.totalorder %s22, 1
        %s335 = scalar_select %p334, %s22, 1
        %s336 = scalar_lea.vmem %s3, %s335
      $region56: #{dice_loss.1} parent=47 // pred_fallthru
        _
      // Predicated region
      $region57: #{dice_loss.1} parent=47 // pred_check
        %p337 = pneg %p160
      $region58: #{dice_loss.1} parent=47 // pred_check_branch
        %339 = sbr.rel (%p337) target = $region60
      $region59: #{dice_loss.1} parent=47 // pred_region
        %p340 = scmp.lt.s32.totalorder %s22, 1
        %s341 = scalar_select %p340, %s22, 1
        %s342 = scalar_lea.vmem %s4, %s341
      $region60: #{dice_loss.1} parent=47 // pred_fallthru
        _
    $region48: #{dice_loss.1} parent=5 // pred_fallthru
      _
  $region6: #{dice_loss.1} parent=0 // loop_footer
    %s15 = sadd.s32 1, %s11
  $region7: #{dice_loss.1} parent=0 // loop_footer_branch
    %10 = sbr.rel target = $region3
  $region8: #{dice_loss.1} parent=0 // loop_exit
    _

</llo_original>
